<compile_context>
chip_gen: v7x
topology: tpu7x:2x2x1
jax: 0.10.0
libtpu: 0.0.40
codegen_flags: <defaults>
</compile_context>

<pallas_src>
import jax
import jax.numpy as jnp
from jax.experimental import pallas as pl
from jax.experimental.pallas import tpu as pltpu


def cnn_classifier_kernel(xp_ref, wconv_ref, bconv_ref, wfc_ref, bfc_ref, o_ref):
    """One batch tile: Conv1d(k=3, pad=1) -> ReLU -> max over L -> Linear.

    xp_ref:    (Bt, L+2, E)  sequences zero-padded along L (conv padding=1)
    wconv_ref: (3*E, Cp)     tap-major flattened conv weight, channel-padded to 128
    bconv_ref: (1, Cp)
    wfc_ref:   (Cp, NCp)
    bfc_ref:   (1, NCp)
    o_ref:     (Bt, NCp)
    """
    xp = xp_ref[...]
    Bt, Lp2, E = xp.shape
    L = Lp2 - 2

    # im2col (width 3): for output position l, concat [x[l-1], x[l], x[l+1]] (E cols each).
    # Built on the input side -> no roll/iota/select on (L, 128) outputs, and each
    # sequence uses its own zero pad rows (no cross-batch leakage).
    lhs = jnp.concatenate(
        [xp[:, 0:L, :], xp[:, 1:L + 1, :], xp[:, 2:L + 2, :]], axis=-1
    ).reshape(Bt * L, 3 * E)

    # Single fused-tap MXU matmul (M = Bt*L, K = 3E) for the whole batch tile.
    conv = jnp.dot(lhs, wconv_ref[...], preferred_element_type=jnp.float32)
    conv = conv + bconv_ref[...]                       # bias (1, Cp) broadcasts
    h = jnp.maximum(conv, 0.0).reshape(Bt, L, -1)      # ReLU
    pooled = jnp.max(h, axis=1)                        # (Bt, Cp): AdaptiveMaxPool1d(1)+squeeze

    # Dropout(0.5) is identity in eval mode.
    # TODO(synk): training-mode Dropout(0.5) would need pltpu.prng_seed/prng_random_bits masking.
    logits = jnp.dot(pooled, wfc_ref[...], preferred_element_type=jnp.float32)
    o_ref[...] = logits + bfc_ref[...]


def _round_up(n, m):
    return ((n + m - 1) // m) * m


def cnn_classifier_forward(x, wconv, bconv, wfc, bfc, *, target_rows=256):
    """x: (B, L, E) float32.  wconv: (3, E, C) with wconv[t] == W_torch[:, :, t].T,
    bconv: (C,), wfc: (C, NC), bfc: (NC,).  Returns (B, NC) float32 logits."""
    B, L, E = x.shape
    K, _, C = wconv.shape
    NC = wfc.shape[1]

    # Lane-dense channel padding (C=100 -> 128, NC=4 -> 128). Padded weight/bias entries
    # are exactly zero, so they contribute nothing through ReLU/maxpool/FC.
    Cp = _round_up(C, 128)
    NCp = _round_up(NC, 128)

    wconv_p = jnp.zeros((K * E, Cp), jnp.float32).at[:, :C].set(
        wconv.reshape(K * E, C).astype(jnp.float32))
    bconv_p = jnp.zeros((1, Cp), jnp.float32).at[:, :C].set(
        bconv.reshape(1, C).astype(jnp.float32))
    wfc_p = jnp.zeros((Cp, NCp), jnp.float32).at[:C, :NC].set(wfc.astype(jnp.float32))
    bfc_p = jnp.zeros((1, NCp), jnp.float32).at[:, :NC].set(
        bfc.reshape(1, NC).astype(jnp.float32))

    # Batch tile: aim for Bt*L ~ target_rows (multiple of the MXU height) per grid step;
    # tiny relative to VMEM (lhs + conv intermediate is well under 1 MiB at 256 rows).
    bt = max(1, target_rows // max(L, 1))
    if bt >= B:
        bt = B                       # single grid step; block equals the full batch dim
    else:
        bt = max(8, (bt // 8) * 8)   # keep the output block sublane-aligned
    b_pad = _round_up(B, bt)

    # Zero-pad: L -> L+2 for conv padding=1, and batch up to a multiple of bt.
    xp = jnp.pad(x.astype(jnp.float32), ((0, b_pad - B), (1, 1), (0, 0)))

    out = pl.pallas_call(
        cnn_classifier_kernel,
        out_shape=jax.ShapeDtypeStruct((b_pad, NCp), jnp.float32),
        grid_spec=pltpu.PrefetchScalarGridSpec(
            num_scalar_prefetch=0,
            grid=(b_pad // bt,),
            in_specs=[
                pl.BlockSpec((bt, L + 2, E), lambda b: (b, 0, 0)),  # batch tile of activations
                pl.BlockSpec((K * E, Cp), lambda b: (0, 0)),        # fused conv weight (resident)
                pl.BlockSpec((1, Cp), lambda b: (0, 0)),            # conv bias
                pl.BlockSpec((Cp, NCp), lambda b: (0, 0)),          # fc weight
                pl.BlockSpec((1, NCp), lambda b: (0, 0)),           # fc bias
            ],
            out_specs=pl.BlockSpec((bt, NCp), lambda b: (b, 0)),
        ),
        compiler_params=pltpu.CompilerParams(
            dimension_semantics=("parallel",)),  # independent batch tiles -> 2 TCs on v7x
    )(xp, wconv_p, bconv_p, wfc_p, bfc_p)

    return out[:B, :NC]


def reference_forward(x, wconv, bconv, wfc, bfc):
    # Pure-JAX reference mirroring PyTorch Conv1d (k=3, pad=1) semantics.
    B, L, E = x.shape
    xp = jnp.pad(x, ((0, 0), (1, 1), (0, 0)))
    conv = sum(jnp.einsum("ble,ec->blc", xp[:, t:t + L], wconv[t]) for t in range(3))
    conv = conv + bconv.reshape(1, 1, -1)
    h = jnp.maximum(conv, 0.0)
    pooled = h.max(axis=1)
    return pooled @ wfc + bfc.reshape(1, -1)


if __name__ == "__main__":
    # Small shapes consistent with the module: embedding_dim=32, num_classes=4,
    # conv channels C=100 (fixed by the module), batch=2, seq_len=8.
    B, L, E, C, NC = 2, 8, 32, 100, 4

    key = jax.random.PRNGKey(0)
    kx, kw1, kb1, kw2, kb2 = jax.random.split(key, 5)

    x = jax.random.normal(kx, (B, L, E), dtype=jnp.float32)

    # Conv1d weight in PyTorch is (C_out=100, C_in=E, K=3); stored here as (K, E, C_out)
    # so wconv[t] == W_torch[:, :, t].T
    wconv = 0.1 * jax.random.normal(kw1, (3, E, C), dtype=jnp.float32)
    bconv = 0.1 * jax.random.normal(kb1, (C,), dtype=jnp.float32)
    # Linear(100 -> num_classes): stored as (C, NC) so logits = pooled @ wfc + bfc
    wfc = 0.1 * jax.random.normal(kw2, (C, NC), dtype=jnp.float32)
    bfc = 0.1 * jax.random.normal(kb2, (NC,), dtype=jnp.float32)

    out = cnn_classifier_forward(x, wconv, bconv, wfc, bfc)
    out = jax.block_until_ready(out)

    ref = reference_forward(x, wconv, bconv, wfc, bfc)
    assert out.shape == (B, NC)
    assert jnp.allclose(out, ref, atol=1e-4, rtol=1e-4), (out, ref)

    print("KERNEL_OK")
</pallas_src>

<mosaic_0001>
module attributes {stable_mosaic.version = 11 : i64} {
  func.func @cnn_classifier_kernel(%arg0: i32, %arg1: memref<2x10x32xf32, #tpu.memory_space<vmem>>, %arg2: memref<96x128xf32, #tpu.memory_space<vmem>>, %arg3: memref<1x128xf32, #tpu.memory_space<vmem>>, %arg4: memref<128x128xf32, #tpu.memory_space<vmem>>, %arg5: memref<1x128xf32, #tpu.memory_space<vmem>>, %arg6: memref<2x128xf32, #tpu.memory_space<vmem>>) attributes {dimension_semantics = [#tpu.dimension_semantics<parallel>], iteration_bounds = array<i64: 1>, scalar_prefetch = 0 : i64, scratch_operands = 0 : i64, tpu.core_type = #tpu.core_type<tc>, window_params = [{transform_indices = @transform_0, window_bounds = array<i64: 2, 10, 32>}, {pipeline_mode = #tpu.pipeline_mode<synchronous>, transform_indices = @transform_1, window_bounds = array<i64: 96, 128>}, {pipeline_mode = #tpu.pipeline_mode<synchronous>, transform_indices = @transform_2, window_bounds = array<i64: 1, 128>}, {pipeline_mode = #tpu.pipeline_mode<synchronous>, transform_indices = @transform_3, window_bounds = array<i64: 128, 128>}, {pipeline_mode = #tpu.pipeline_mode<synchronous>, transform_indices = @transform_4, window_bounds = array<i64: 1, 128>}, {transform_indices = @transform_5, window_bounds = array<i64: 2, 128>}]} {
    %c0 = arith.constant 0 : index
    %c0_0 = arith.constant 0 : index
    %c0_1 = arith.constant 0 : index
    %0 = vector.load %arg1[%c0, %c0_0, %c0_1] : memref<2x10x32xf32, #tpu.memory_space<vmem>>, vector<2x10x32xf32>
    %1 = vector.extract_strided_slice %0 {offsets = [0, 0, 0], sizes = [2, 8, 32], strides = [1, 1, 1]} : vector<2x10x32xf32> to vector<2x8x32xf32>
    %2 = vector.extract_strided_slice %0 {offsets = [0, 1, 0], sizes = [2, 8, 32], strides = [1, 1, 1]} : vector<2x10x32xf32> to vector<2x8x32xf32>
    %3 = vector.extract_strided_slice %0 {offsets = [0, 2, 0], sizes = [2, 8, 32], strides = [1, 1, 1]} : vector<2x10x32xf32> to vector<2x8x32xf32>
    %4 = tpu.concatenate %1, %2, %3 in 2 : vector<2x8x32xf32>, vector<2x8x32xf32>, vector<2x8x32xf32> -> vector<2x8x96xf32>
    %5 = vector.shape_cast %4 : vector<2x8x96xf32> to vector<16x96xf32>
    %c0_2 = arith.constant 0 : index
    %c0_3 = arith.constant 0 : index
    %6 = vector.load %arg2[%c0_2, %c0_3] : memref<96x128xf32, #tpu.memory_space<vmem>>, vector<96x128xf32>
    %cst = arith.constant dense<0.000000e+00> : vector<16x128xf32>
    %7 = tpu.matmul %5, %6, %cst {dimension_numbers = #tpu.dot_dimension_numbers<[1], [0], [0], [1], [0, 0, 1, 1], [], []>} : vector<16x96xf32>, vector<96x128xf32>, vector<16x128xf32> -> vector<16x128xf32>
    %c0_4 = arith.constant 0 : index
    %c0_5 = arith.constant 0 : index
    %8 = vector.load %arg3[%c0_4, %c0_5] : memref<1x128xf32, #tpu.memory_space<vmem>>, vector<1x128xf32>
    %9 = vector.broadcast %8 : vector<1x128xf32> to vector<16x128xf32>
    %10 = arith.addf %7, %9 : vector<16x128xf32>
    %cst_6 = arith.constant 0.000000e+00 : f32
    %11 = vector.broadcast %cst_6 : f32 to vector<16x128xf32>
    %12 = arith.maximumf %10, %11 : vector<16x128xf32>
    %13 = vector.shape_cast %12 : vector<16x128xf32> to vector<2x8x128xf32>
    %cst_7 = arith.constant dense<0xFF800000> : vector<2x128xf32>
    %14 = vector.multi_reduction <maximumf>, %13, %cst_7 [1] : vector<2x8x128xf32> to vector<2x128xf32>
    %c0_8 = arith.constant 0 : index
    %c0_9 = arith.constant 0 : index
    %15 = vector.load %arg4[%c0_8, %c0_9] : memref<128x128xf32, #tpu.memory_space<vmem>>, vector<128x128xf32>
    %cst_10 = arith.constant dense<0.000000e+00> : vector<2x128xf32>
    %16 = tpu.matmul %14, %15, %cst_10 {dimension_numbers = #tpu.dot_dimension_numbers<[1], [0], [0], [1], [0, 0, 1, 1], [], []>} : vector<2x128xf32>, vector<128x128xf32>, vector<2x128xf32> -> vector<2x128xf32>
    %c0_11 = arith.constant 0 : index
    %c0_12 = arith.constant 0 : index
    %17 = vector.load %arg5[%c0_11, %c0_12] : memref<1x128xf32, #tpu.memory_space<vmem>>, vector<1x128xf32>
    %18 = vector.broadcast %17 : vector<1x128xf32> to vector<2x128xf32>
    %19 = arith.addf %16, %18 : vector<2x128xf32>
    %c0_13 = arith.constant 0 : index
    %c0_14 = arith.constant 0 : index
    %20 = vector.load %arg6[%c0_13, %c0_14] : memref<2x128xf32, #tpu.memory_space<vmem>>, vector<2x128xf32>
    tpu.vector_store %arg6[%c0_13, %c0_14], %19 {strides = array<i32>} : memref<2x128xf32, #tpu.memory_space<vmem>>, vector<2x128xf32>,
    return
  }
  func.func @transform_0(%arg0: i32) -> (i32, i32, i32) {
    %c0_i32 = arith.constant 0 : i32
    %c0_i32_0 = arith.constant 0 : i32
    %c0_i32_1 = arith.constant 0 : i32
    return %arg0, %c0_i32, %c0_i32_0 : i32, i32, i32
  }
  func.func @transform_1(%arg0: i32) -> (i32, i32) {
    %c0_i32 = arith.constant 0 : i32
    %c0_i32_0 = arith.constant 0 : i32
    %c0_i32_1 = arith.constant 0 : i32
    return %c0_i32, %c0_i32_0 : i32, i32
  }
  func.func @transform_2(%arg0: i32) -> (i32, i32) {
    %c0_i32 = arith.constant 0 : i32
    %c0_i32_0 = arith.constant 0 : i32
    %c0_i32_1 = arith.constant 0 : i32
    return %c0_i32, %c0_i32_0 : i32, i32
  }
  func.func @transform_3(%arg0: i32) -> (i32, i32) {
    %c0_i32 = arith.constant 0 : i32
    %c0_i32_0 = arith.constant 0 : i32
    %c0_i32_1 = arith.constant 0 : i32
    return %c0_i32, %c0_i32_0 : i32, i32
  }
  func.func @transform_4(%arg0: i32) -> (i32, i32) {
    %c0_i32 = arith.constant 0 : i32
    %c0_i32_0 = arith.constant 0 : i32
    %c0_i32_1 = arith.constant 0 : i32
    return %c0_i32, %c0_i32_0 : i32, i32
  }
  func.func @transform_5(%arg0: i32) -> (i32, i32) {
    %c0_i32 = arith.constant 0 : i32
    %c0_i32_0 = arith.constant 0 : i32
    return %arg0, %c0_i32 : i32, i32
  }
}

</mosaic_0001>

<llo_original>
// kernel: tpu_custom_call.1
$region0: #{tpu_custom_call.1}
  #allocation0 [shape = 'u32[]', space=smem, size = 0x4, offset = 0x4, fixed_abs, tag = 'smem constant byte address 0x4 - core index']
  #allocation1 [shape = 'u32[144,128]{1,0:T(1,128)}', space=vmem, size = 0x12000, scoped, tag = 'internal scratch']
  %s0 = inlined_call_operand.vmem [shape: f32[2,10,32], index: 0, kind: input, shape index: {}]
  %s1 = inlined_call_operand.hbm [shape: f32[96,128], index: 1, kind: input, shape index: {}]
  %s2 = inlined_call_operand.vmem [shape: f32[1,128], index: 2, kind: input, shape index: {}]
  %s3 = inlined_call_operand.hbm [shape: f32[128,128], index: 3, kind: input, shape index: {}]
  %s4 = inlined_call_operand.vmem [shape: f32[1,128], index: 4, kind: input, shape index: {}]
  %s5 = inlined_call_operand.hbm [shape: f32[2,128], index: 5, kind: output, shape index: {}]
  %s6 = sld [smem:[#allocation0]]
  $region38: #{tpu_custom_call.1} parent=0
    _
  %s8 = ssub.s32 1, %s6
  %s9 = scalar_select 0, %s8, %s6
  $region1: #{tpu_custom_call.1} parent=0
    #allocation2 [shape = 'u8[49152]{0}', space=vmem, size = 0xc000, scoped, tag = 'input window, operand 1, single buffered']
    #allocation3 [shape = 's32[1]{0}', space=sflag, size = 0x4, scoped, tag = 'scoped memory for tpu_custom_call.1']
    #allocation4 [shape = 's32[1]{0}', space=sflag, size = 0x4, scoped, tag = 'scoped memory for tpu_custom_call.1']
    #allocation5 [shape = 'u8[65536]{0}', space=vmem, size = 0x10000, scoped, tag = 'input window, operand 3, single buffered']
    #allocation6 [shape = 's32[1]{0}', space=sflag, size = 0x4, scoped, tag = 'scoped memory for tpu_custom_call.1']
    #allocation7 [shape = 'u8[1024]{0}', space=vmem, size = 0x400, scoped, tag = 'output window, operand 0, single buffered']
    %10 = vsyncpa [#allocation3], 0
    %11 = vsyncpa [#allocation6], 0
    %12 = vsyncpa [#allocation4], 0
    // Predicated region
    $region2: #{tpu_custom_call.1} parent=1 // pred_check
      _
    $region3: #{tpu_custom_call.1} parent=1 // pred_check_branch
      %14 = sbr.rel (0) target = $region5
    $region4: #{tpu_custom_call.1} parent=1 // pred_region
      _
    $region5: #{tpu_custom_call.1} parent=1 // pred_fallthru
      _
    // Predicated region
    $region6: #{tpu_custom_call.1} parent=1 // pred_check
      _
    $region7: #{tpu_custom_call.1} parent=1 // pred_check_branch
      %16 = sbr.rel (0) target = $region9
    $region8: #{tpu_custom_call.1} parent=1 // pred_region
      %s18 = ssub.s32 1536, 1536
      %19 = vsyncadd [#allocation3], %s18
      %s20 = sshll.u32 [#allocation2], 4
      %s21 = int_to_ptr.vmem [resolvable:$true] %s20
      %26 = dma.hbm_to_vmem [thread:$0]  %s1, 1536, %s21, [#allocation3], 128, 128, 8
    $region9: #{tpu_custom_call.1} parent=1 // pred_fallthru
      _
    // Predicated region
    $region10: #{tpu_custom_call.1} parent=1 // pred_check
      _
    $region11: #{tpu_custom_call.1} parent=1 // pred_check_branch
      %28 = sbr.rel (0) target = $region13
    $region12: #{tpu_custom_call.1} parent=1 // pred_region
      _
    $region13: #{tpu_custom_call.1} parent=1 // pred_fallthru
      _
    // Predicated region
    $region14: #{tpu_custom_call.1} parent=1 // pred_check
      _
    $region15: #{tpu_custom_call.1} parent=1 // pred_check_branch
      %30 = sbr.rel (0) target = $region17
    $region16: #{tpu_custom_call.1} parent=1 // pred_region
      %s32 = ssub.s32 2048, 2048
      %33 = vsyncadd [#allocation6], %s32
      %s34 = sshll.u32 [#allocation5], 4
      %s35 = int_to_ptr.vmem [resolvable:$true] %s34
      %40 = dma.hbm_to_vmem [thread:$0]  %s3, 2048, %s35, [#allocation6], 128, 128, 8
    $region17: #{tpu_custom_call.1} parent=1 // pred_fallthru
      _
    // Predicated region
    $region18: #{tpu_custom_call.1} parent=1 // pred_check
      _
    $region19: #{tpu_custom_call.1} parent=1 // pred_check_branch
      %42 = sbr.rel (0) target = $region21
    $region20: #{tpu_custom_call.1} parent=1 // pred_region
      _
    $region21: #{tpu_custom_call.1} parent=1 // pred_fallthru
      _
    // Predicated region
    $region22: #{tpu_custom_call.1} parent=1 // pred_check
      _
    $region23: #{tpu_custom_call.1} parent=1 // pred_check_branch
      %44 = sbr.rel (0) target = $region25
    $region24: #{tpu_custom_call.1} parent=1 // pred_region
      %45 = dma.done [#allocation3], 1536
    $region25: #{tpu_custom_call.1} parent=1 // pred_fallthru
      _
    // Predicated region
    $region26: #{tpu_custom_call.1} parent=1 // pred_check
      _
    $region27: #{tpu_custom_call.1} parent=1 // pred_check_branch
      %47 = sbr.rel (0) target = $region29
    $region28: #{tpu_custom_call.1} parent=1 // pred_region
      %48 = dma.done [#allocation6], 2048
    $region29: #{tpu_custom_call.1} parent=1 // pred_fallthru
      _
    %v49 = vld [vmem:[%s0] sm:$0xff]
    %v50 = vld [vmem:[%s0 + $0x8] sm:$0x3]
    %v51 = vld [vmem:[%s0 + $0x10] sm:$0xff]
    %v52 = vld [vmem:[%s0 + $0x18] sm:$0x3]
    %vm57 = vcmask 1046528
    %v58 = vrot.slane %v49, 1
    %v59 = vrot.slane %v50, 1
    %v60 = vsel %vm57, %v58, %v59
    %v61 = vrot.slane %v51, 1
    %v62 = vrot.slane %v52, 1
    %v63 = vsel %vm57, %v61, %v62
    %64 = vrot.lane.b32.xlu0 %v60, 32
    %v65 = vpop.permute.xlu0 %64
    %66 = vrot.lane.b32.xlu0 %v63, 32
    %v67 = vpop.permute.xlu0 %66
    %vm70 = vcmask 1045504
    %v71 = vrot.slane %v49, 2
    %v72 = vrot.slane %v50, 2
    %v73 = vsel %vm70, %v71, %v72
    %v74 = vrot.slane %v51, 2
    %v75 = vrot.slane %v52, 2
    %v76 = vsel %vm70, %v74, %v75
    %77 = vrot.lane.b32.xlu0 %v73, 64
    %v78 = vpop.permute.xlu0 %77
    %79 = vrot.lane.b32.xlu0 %v76, 64
    %v80 = vpop.permute.xlu0 %79
    %vm83 = vcmask 261120
    %v84 = vsel %vm83, %v49, %v65
    %v85 = vsel %vm83, %v51, %v67
    %vm86 = vcmask 523264
    %v87 = vsel %vm86, %v84, %v78
    %v88 = vsel %vm86, %v85, %v80
    %v89 = vld [vmem:[#allocation2] sm:$0xff]
    %v90 = vld [vmem:[#allocation2 + $0x8] sm:$0xff]
    %v91 = vld [vmem:[#allocation2 + $0x10] sm:$0xff]
    %v92 = vld [vmem:[#allocation2 + $0x18] sm:$0xff]
    %v93 = vld [vmem:[#allocation2 + $0x20] sm:$0xff]
    %v94 = vld [vmem:[#allocation2 + $0x28] sm:$0xff]
    %v95 = vld [vmem:[#allocation2 + $0x30] sm:$0xff]
    %v96 = vld [vmem:[#allocation2 + $0x38] sm:$0xff]
    %v97 = vld [vmem:[#allocation2 + $0x40] sm:$0xff]
    %v98 = vld [vmem:[#allocation2 + $0x48] sm:$0xff]
    %v99 = vld [vmem:[#allocation2 + $0x50] sm:$0xff]
    %v100 = vld [vmem:[#allocation2 + $0x58] sm:$0xff]
    %v101 = vld [vmem:[%s2] sm:$0x1]
    %v103 = vlaneseq
    %v104 = vshrl.u32 %v103, 7
    %v105 = vsub.s32 0, %v104
    %v106 = vrot.slane %v101, %v105
    %vm108 = vcmask 785408
    %v110 = vsel %vm108, %v87, 0
    %v113 = vsel %vm108, %v88, 0
    %115 = vmatprep.subr.mxu0 0.0
    %116 = vmatpush1.msra.mxu0 %v89
    %117 = vmatprep.subr.mxu0 0.0
    %118 = vmatpush1.msra.mxu0 %v90
    %119 = vmatprep.subr.mxu0 0.0
    %120 = vmatpush1.msra.mxu0 %v91
    %121 = vmatprep.subr.mxu0 0.0
    %122 = vmatpush1.msra.mxu0 %v92
    %123 = vmatprep.subr.mxu0 0.0
    %124 = vmatpush1.msra.mxu0 %v93
    %125 = vmatprep.subr.mxu0 0.0
    %126 = vmatpush1.msra.mxu0 %v94
    %127 = vmatprep.subr.mxu0 0.0
    %128 = vmatpush1.msra.mxu0 %v95
    %129 = vmatprep.subr.mxu0 0.0
    %130 = vmatpush1.msra.mxu0 %v96
    %131 = vmatprep.subr.mxu0 0.0
    %132 = vmatpush1.msra.mxu0 %v97
    %133 = vmatprep.subr.mxu0 0.0
    %134 = vmatpush1.msra.mxu0 %v98
    %135 = vmatprep.subr.mxu0 0.0
    %136 = vmatpush1.msra.mxu0 %v99
    %137 = vmatprep.subr.mxu0 0.0
    %138 = vmatpush1.msra.mxu0 %v100
    %139 = vmatprep.subr.mxu0 0.0
    %140 = vmatpush1.msra.mxu0 0.0
    %141 = vmatprep.subr.mxu0 0.0
    %142 = vmatpush1.msra.mxu0 0.0
    %143 = vmatprep.subr.mxu0 0.0
    %144 = vmatpush1.msra.mxu0 0.0
    %145 = vmatprep.subr.mxu0 0.0
    %146 = vmatpush1.msra.mxu0 0.0
    %147 = vmatprep.subr.mxu0 0.0
    %148 = vmatpush1.msra.mxu0 0.0
    %149 = vmatprep.subr.mxu0 0.0
    %150 = vmatpush1.msra.mxu0 0.0
    %151 = vmatprep.subr.mxu0 0.0
    %152 = vmatpush1.msra.mxu0 0.0
    %153 = vmatprep.subr.mxu0 0.0
    %154 = vmatpush1.msra.mxu0 0.0
    %155 = vmatprep.subr.mxu0 0.0
    %156 = vmatpush1.msra.mxu0 0.0
    %157 = vmatprep.subr.mxu0 0.0
    %158 = vmatpush1.msra.mxu0 0.0
    %159 = vmatprep.subr.mxu0 0.0
    %160 = vmatpush1.msra.mxu0 0.0
    %161 = vmatprep.subr.mxu0 0.0
    %162 = vmatpush1.msra.mxu0 0.0
    %163 = vmatprep.subr.mxu0 0.0
    %164 = vmatpush1.msra.mxu0 0.0
    %165 = vmatprep.subr.mxu0 0.0
    %166 = vmatpush1.msra.mxu0 0.0
    %167 = vmatprep.subr.mxu0 0.0
    %168 = vmatpush1.msra.mxu0 0.0
    %169 = vmatprep.subr.mxu0 0.0
    %170 = vmatpush1.msra.mxu0 0.0
    %171 = vmatprep.subr.mxu0 0.0
    %172 = vmatpush1.msra.mxu0 0.0
    %173 = vmatprep.subr.mxu0 0.0
    %174 = vmatpush1.msra.mxu0 0.0
    %175 = vmatprep.subr.mxu0 0.0
    %176 = vmatpush1.msra.mxu0 0.0
    %177 = vmatprep.subr.mxu0 0.0
    %178 = vmatpush1.msra.mxu0 0.0
    %179 = vmatprep.mubr.f32.mxu0 0.0
    %180 = vmatmul.mubr.f32.gmra.mrb[0].mxu0 %v110
    %v181 = vpop.f32.mrb[0].mxu0
    %v182 = vadd.f32 %v106, %v181
    %v183 = vpop.f32.mrb[0].mxu0
    %184 = vmatprep.mubr.f32.mxu0 0.0
    %185 = vmatmul.mubr.f32.gmra.mrb[0].mxu0 %v113
    %v186 = vpop.f32.mrb[0].mxu0
    %v187 = vadd.f32 %v106, %v186
    %v188 = vpop.f32.mrb[0].mxu0
    %189 = vdwg.mxu0
    %v190 = vmax.f32 %v182, 0.0
    %v191 = vmax.f32 %v187, 0.0
    %v192 = vrot.slane %v190, 4
    %v193 = vmax.f32 %v190, %v192
    %v194 = vrot.slane %v193, 2
    %v195 = vmax.f32 %v193, %v194
    %v196 = vrot.slane %v195, 1
    %v197 = vmax.f32 %v195, %v196
    %v198 = vrot.slane %v191, 4
    %v199 = vmax.f32 %v191, %v198
    %v200 = vrot.slane %v199, 2
    %v201 = vmax.f32 %v199, %v200
    %v202 = vrot.slane %v201, 1
    %v203 = vmax.f32 %v201, %v202
    %v204 = vld [vmem:[#allocation5] sm:$0xff]
    %v205 = vld [vmem:[#allocation5 + $0x8] sm:$0xff]
    %v206 = vld [vmem:[#allocation5 + $0x10] sm:$0xff]
    %v207 = vld [vmem:[#allocation5 + $0x18] sm:$0xff]
    %v208 = vld [vmem:[#allocation5 + $0x20] sm:$0xff]
    %v209 = vld [vmem:[#allocation5 + $0x28] sm:$0xff]
    %v210 = vld [vmem:[#allocation5 + $0x30] sm:$0xff]
    %v211 = vld [vmem:[#allocation5 + $0x38] sm:$0xff]
    %v212 = vld [vmem:[#allocation5 + $0x40] sm:$0xff]
    %v213 = vld [vmem:[#allocation5 + $0x48] sm:$0xff]
    %v214 = vld [vmem:[#allocation5 + $0x50] sm:$0xff]
    %v215 = vld [vmem:[#allocation5 + $0x58] sm:$0xff]
    %v216 = vld [vmem:[#allocation5 + $0x60] sm:$0xff]
    %v217 = vld [vmem:[#allocation5 + $0x68] sm:$0xff]
    %v218 = vld [vmem:[#allocation5 + $0x70] sm:$0xff]
    %v219 = vld [vmem:[#allocation5 + $0x78] sm:$0xff]
    %v220 = vld [vmem:[%s4] sm:$0x1]
    %v222 = vlaneseq
    %v223 = vshrl.u32 %v222, 7
    %v224 = vsub.s32 0, %v223
    %v225 = vrot.slane %v220, %v224
    %vm229 = vcmask 1041409
    %v230 = vsel %vm229, %v203, %v197
    %232 = vmatprep.subr.mxu0 0.0
    %233 = vmatpush1.msra.mxu0 %v204
    %234 = vmatprep.subr.mxu0 0.0
    %235 = vmatpush1.msra.mxu0 %v205
    %236 = vmatprep.subr.mxu0 0.0
    %237 = vmatpush1.msra.mxu0 %v206
    %238 = vmatprep.subr.mxu0 0.0
    %239 = vmatpush1.msra.mxu0 %v207
    %240 = vmatprep.subr.mxu0 0.0
    %241 = vmatpush1.msra.mxu0 %v208
    %242 = vmatprep.subr.mxu0 0.0
    %243 = vmatpush1.msra.mxu0 %v209
    %244 = vmatprep.subr.mxu0 0.0
    %245 = vmatpush1.msra.mxu0 %v210
    %246 = vmatprep.subr.mxu0 0.0
    %247 = vmatpush1.msra.mxu0 %v211
    %248 = vmatprep.subr.mxu0 0.0
    %249 = vmatpush1.msra.mxu0 %v212
    %250 = vmatprep.subr.mxu0 0.0
    %251 = vmatpush1.msra.mxu0 %v213
    %252 = vmatprep.subr.mxu0 0.0
    %253 = vmatpush1.msra.mxu0 %v214
    %254 = vmatprep.subr.mxu0 0.0
    %255 = vmatpush1.msra.mxu0 %v215
    %256 = vmatprep.subr.mxu0 0.0
    %257 = vmatpush1.msra.mxu0 %v216
    %258 = vmatprep.subr.mxu0 0.0
    %259 = vmatpush1.msra.mxu0 %v217
    %260 = vmatprep.subr.mxu0 0.0
    %261 = vmatpush1.msra.mxu0 %v218
    %262 = vmatprep.subr.mxu0 0.0
    %263 = vmatpush1.msra.mxu0 %v219
    %264 = vmatprep.subr.mxu0 0.0
    %265 = vmatpush1.msra.mxu0 0.0
    %266 = vmatprep.subr.mxu0 0.0
    %267 = vmatpush1.msra.mxu0 0.0
    %268 = vmatprep.subr.mxu0 0.0
    %269 = vmatpush1.msra.mxu0 0.0
    %270 = vmatprep.subr.mxu0 0.0
    %271 = vmatpush1.msra.mxu0 0.0
    %272 = vmatprep.subr.mxu0 0.0
    %273 = vmatpush1.msra.mxu0 0.0
    %274 = vmatprep.subr.mxu0 0.0
    %275 = vmatpush1.msra.mxu0 0.0
    %276 = vmatprep.subr.mxu0 0.0
    %277 = vmatpush1.msra.mxu0 0.0
    %278 = vmatprep.subr.mxu0 0.0
    %279 = vmatpush1.msra.mxu0 0.0
    %280 = vmatprep.subr.mxu0 0.0
    %281 = vmatpush1.msra.mxu0 0.0
    %282 = vmatprep.subr.mxu0 0.0
    %283 = vmatpush1.msra.mxu0 0.0
    %284 = vmatprep.subr.mxu0 0.0
    %285 = vmatpush1.msra.mxu0 0.0
    %286 = vmatprep.subr.mxu0 0.0
    %287 = vmatpush1.msra.mxu0 0.0
    %288 = vmatprep.subr.mxu0 0.0
    %289 = vmatpush1.msra.mxu0 0.0
    %290 = vmatprep.subr.mxu0 0.0
    %291 = vmatpush1.msra.mxu0 0.0
    %292 = vmatprep.subr.mxu0 0.0
    %293 = vmatpush1.msra.mxu0 0.0
    %294 = vmatprep.subr.mxu0 0.0
    %295 = vmatpush1.msra.mxu0 0.0
    %296 = vmatprep.mubr.f32.mxu0 0.0
    %297 = vmatmul.mubr.f32.gmra.mrb[0].mxu0 %v230
    %v298 = vpop.f32.mrb[0].mxu0
    %v299 = vadd.f32 %v225, %v298
    %v300 = vpop.f32.mrb[0].mxu0
    %301 = vdwg.mxu0
    %302 = vst [vmem:[#allocation7] sm:$0x3] %v299
    // Predicated region
    $region30: #{tpu_custom_call.1} parent=1 // pred_check
      _
    $region31: #{tpu_custom_call.1} parent=1 // pred_check_branch
      %304 = sbr.rel (0) target = $region33
    $region32: #{tpu_custom_call.1} parent=1 // pred_region
      %s306 = ssub.s32 32, 32
      %307 = vsyncadd [#allocation4], %s306
      %s309 = sshll.u32 [#allocation7], 4
      %s310 = int_to_ptr.vmem [resolvable:$true] %s309
      %312 = dma.vmem_to_hbm [thread:$0]  %s310, 32, %s5, [#allocation4]
    $region33: #{tpu_custom_call.1} parent=1 // pred_fallthru
      _
    // Predicated region
    $region34: #{tpu_custom_call.1} parent=1 // pred_check
      _
    $region35: #{tpu_custom_call.1} parent=1 // pred_check_branch
      %314 = sbr.rel (0) target = $region37
    $region36: #{tpu_custom_call.1} parent=1 // pred_region
      %315 = dma.done [#allocation4], 32
    $region37: #{tpu_custom_call.1} parent=1 // pred_fallthru
      _
    %316 = vsyncpa [#allocation3], 1
    %317 = vsyncpa [#allocation6], 1
    %318 = vsyncpa [#allocation4], 1

</llo_original>
